<compile_context>
chip_gen: v7x
topology: tpu7x:2x2x1
jax: 0.10.0
libtpu: 0.0.40
codegen_flags: <defaults>
</compile_context>

<pallas_src>
import functools

import jax
import jax.numpy as jnp
import numpy as np
from jax import lax
from jax.experimental import pallas as pl
from jax.experimental.pallas import tpu as pltpu

KSIZE = 5
PAD = 2


def _dsc_kernel(x_ref, wb_ref, shift_ref, o_ref, *, H, B):
    # x_ref:     (B, H+4, K_pad)      bf16 channel-packed, zero-padded input
    # wb_ref:    (5, K_pad, W*C_out)  bf16 banded dw+pw+BN-scale weights
    # shift_ref: (1, W*C_out)         f32  folded BN shift (lane-packed)
    # o_ref:     (B, H, W*C_out)      f32  lane-dense output
    shift = shift_ref[...]
    wbs = [wb_ref[kh] for kh in range(KSIZE)]          # (K_pad, W*C_out) each

    for b in range(B):                                 # static unroll, B small
        x = x_ref[b]                                   # (H+4, K_pad) bf16
        # 5 banded MXU matmuls, f32 accumulation; no lane-offset slicing,
        # no per-tap VPU multiplies.
        acc = jnp.dot(x[0:H, :], wbs[0],
                      preferred_element_type=jnp.float32)
        for kh in range(1, KSIZE):
            acc = acc + jnp.dot(x[kh:kh + H, :], wbs[kh],
                                preferred_element_type=jnp.float32)
        # Folded BN shift + ReLU; full-width unmasked store.
        o_ref[b] = jnp.maximum(acc + shift, 0.0).astype(o_ref.dtype)


def depthwise_separable_conv(x_nchw, w_dw, w_pw, bn_gamma, bn_beta,
                             bn_mean, bn_var, eps=1e-5, images_per_step=None):
    """x_nchw: (N, C_in, H, W).  w_dw: (C_in, 1, 5, 5) PyTorch depthwise layout.
    w_pw: (C_out, C_in, 1, 1).  Returns (N, C_out, H, W)."""
    N, C_in, H, W = x_nchw.shape
    C_out = w_pw.shape[0]
    Hp, Wp = H + 2 * PAD, W + 2 * PAD
    WC_out = W * C_out
    K_raw = Wp * C_in
    K_pad = ((K_raw + 127) // 128) * 128               # lane-pad contraction dim

    if images_per_step is None:
        images_per_step = N      # one grid step: amortizes overhead on 1-TC chips
    assert N % images_per_step == 0
    B = images_per_step

    # ---- input glue: NCHW -> channel-packed, zero-padded, lane-padded bf16 --
    x_nhwc = jnp.transpose(x_nchw, (0, 2, 3, 1)).astype(jnp.float32)
    x_pad = jnp.pad(x_nhwc, ((0, 0), (PAD, PAD), (PAD, PAD), (0, 0)))
    x_packed = x_pad.reshape(N, Hp, K_raw)
    x_packed = jnp.pad(x_packed, ((0, 0), (0, 0), (0, K_pad - K_raw)))
    x_packed = x_packed.astype(jnp.bfloat16)           # (N, H+4, K_pad)

    # ---- one-time weight prep: banded dw + pw + BN-scale matrices -----------
    scale = (bn_gamma / jnp.sqrt(bn_var + eps)).astype(jnp.float32)   # (C_out,)
    shift = (bn_beta - bn_mean * scale).astype(jnp.float32)           # (C_out,)
    pw_scaled = (w_pw[:, :, 0, 0].astype(jnp.float32)
                 * scale[:, None]).T                                  # (C_in, C_out)
    wd_cik = w_dw[:, 0, :, :].astype(jnp.float32)                     # (C_in, 5, 5)

    # Banded matrix per kh: entry[(w_in, c_in), (w_out, c_out)] =
    #   wd[c_in, kh, w_in - w_out] * pw_scaled[c_in, c_out]  if 0 <= w_in-w_out < 5
    w_in = jnp.arange(Wp)
    w_out = jnp.arange(W)
    kw = w_in[:, None] - w_out[None, :]                               # (Wp, W)
    valid = ((kw >= 0) & (kw < KSIZE)).astype(jnp.float32)
    kw_c = jnp.clip(kw, 0, KSIZE - 1)
    tap = wd_cik[:, :, kw_c] * valid                                  # (C_in, 5, Wp, W)
    banded = jnp.einsum("ckvw,cd->kvcwd", tap, pw_scaled)             # (5, Wp, C_in, W, C_out)
    banded = banded.reshape(KSIZE, K_raw, WC_out)
    banded = jnp.pad(banded, ((0, 0), (0, K_pad - K_raw), (0, 0)))    # zero rows for lane pad
    banded = banded.astype(jnp.bfloat16)                              # (5, K_pad, W*C_out)

    shift_packed = jnp.tile(shift.reshape(1, C_out), (1, W))          # (1, W*C_out) f32

    kernel = functools.partial(_dsc_kernel, H=H, B=B)

    out_packed = pl.pallas_call(
        kernel,
        out_shape=jax.ShapeDtypeStruct((N, H, WC_out), jnp.float32),
        grid_spec=pltpu.PrefetchScalarGridSpec(
            num_scalar_prefetch=0,
            grid=(N // B,),
            in_specs=[
                pl.BlockSpec((B, Hp, K_pad), lambda n: (n, 0, 0)),
                pl.BlockSpec((KSIZE, K_pad, WC_out), lambda n: (0, 0, 0)),
                pl.BlockSpec((1, WC_out), lambda n: (0, 0)),
            ],
            out_specs=pl.BlockSpec((B, H, WC_out), lambda n: (n, 0, 0)),
        ),
        compiler_params=pltpu.CompilerParams(
            dimension_semantics=("parallel",)),
    )(x_packed, banded, shift_packed)

    # Unpack lanes back to NCHW (cheap wrapper glue).
    out_nhwc = out_packed.reshape(N, H, W, C_out)
    return jnp.transpose(out_nhwc, (0, 3, 1, 2))


def _reference(x_nchw, w_dw, w_pw, bn_gamma, bn_beta, bn_mean, bn_var, eps=1e-5):
    """Pure-JAX reference (lax.conv) for validation."""
    C_in = x_nchw.shape[1]
    y = lax.conv_general_dilated(
        x_nchw.astype(jnp.float32), w_dw.astype(jnp.float32),
        window_strides=(1, 1), padding=((PAD, PAD), (PAD, PAD)),
        feature_group_count=C_in,
        dimension_numbers=("NCHW", "OIHW", "NCHW"))
    y = lax.conv_general_dilated(
        y, w_pw.astype(jnp.float32), window_strides=(1, 1), padding="VALID",
        dimension_numbers=("NCHW", "OIHW", "NCHW"))
    scale = (bn_gamma / jnp.sqrt(bn_var + eps)).reshape(1, -1, 1, 1)
    shift = (bn_beta - bn_mean * (bn_gamma / jnp.sqrt(bn_var + eps))).reshape(1, -1, 1, 1)
    return jnp.maximum(y * scale + shift, 0.0)


if __name__ == "__main__":
    key = jax.random.PRNGKey(0)
    N, C_in, C_out, H, W = 2, 4, 8, 16, 16

    k_x, k_dw, k_pw = jax.random.split(key, 3)
    x = jax.random.normal(k_x, (N, C_in, H, W), jnp.float32)

    # Deterministic parameter init (shapes match nn.Conv2d / nn.BatchNorm2d).
    w_dw = jax.random.normal(k_dw, (C_in, 1, KSIZE, KSIZE), jnp.float32) * 0.1
    w_pw = jax.random.normal(k_pw, (C_out, C_in, 1, 1), jnp.float32) * 0.1
    # BatchNorm2d default init; eval-mode (running-stats) semantics.
    bn_gamma = jnp.ones((C_out,), jnp.float32)
    bn_beta = jnp.zeros((C_out,), jnp.float32)
    bn_mean = jnp.zeros((C_out,), jnp.float32)
    bn_var = jnp.ones((C_out,), jnp.float32)

    out = depthwise_separable_conv(x, w_dw, w_pw, bn_gamma, bn_beta, bn_mean, bn_var)
    out = jax.block_until_ready(out)

    ref = _reference(x, w_dw, w_pw, bn_gamma, bn_beta, bn_mean, bn_var)
    # bf16 HBM storage (f32 accumulation) => relaxed tolerance vs. the f32 reference.
    np.testing.assert_allclose(np.asarray(out), np.asarray(ref), atol=2e-2, rtol=2e-2)

    print("KERNEL_OK")
</pallas_src>

<mosaic_0001>
module attributes {stable_mosaic.version = 11 : i64} {
  func.func @_dsc_kernel(%arg0: i32, %arg1: memref<2x20x128xbf16, #tpu.memory_space<vmem>>, %arg2: memref<5x128x128xbf16, #tpu.memory_space<vmem>>, %arg3: memref<1x128xf32, #tpu.memory_space<vmem>>, %arg4: memref<2x16x128xf32, #tpu.memory_space<vmem>>) attributes {dimension_semantics = [#tpu.dimension_semantics<parallel>], iteration_bounds = array<i64: 1>, scalar_prefetch = 0 : i64, scratch_operands = 0 : i64, tpu.core_type = #tpu.core_type<tc>, window_params = [{transform_indices = @transform_0, window_bounds = array<i64: 2, 20, 128>}, {pipeline_mode = #tpu.pipeline_mode<synchronous>, transform_indices = @transform_1, window_bounds = array<i64: 5, 128, 128>}, {pipeline_mode = #tpu.pipeline_mode<synchronous>, transform_indices = @transform_2, window_bounds = array<i64: 1, 128>}, {transform_indices = @transform_3, window_bounds = array<i64: 2, 16, 128>}]} {
    %c0 = arith.constant 0 : index
    %c0_0 = arith.constant 0 : index
    %0 = vector.load %arg3[%c0, %c0_0] : memref<1x128xf32, #tpu.memory_space<vmem>>, vector<1x128xf32>
    %c0_1 = arith.constant 0 : index
    %c0_2 = arith.constant 0 : index
    %c0_3 = arith.constant 0 : index
    %1 = vector.load %arg2[%c0_1, %c0_2, %c0_3] : memref<5x128x128xbf16, #tpu.memory_space<vmem>>, vector<1x128x128xbf16>
    %2 = vector.shape_cast %1 : vector<1x128x128xbf16> to vector<128x128xbf16>
    %c1 = arith.constant 1 : index
    %c0_4 = arith.constant 0 : index
    %c0_5 = arith.constant 0 : index
    %3 = vector.load %arg2[%c1, %c0_4, %c0_5] : memref<5x128x128xbf16, #tpu.memory_space<vmem>>, vector<1x128x128xbf16>
    %4 = vector.shape_cast %3 : vector<1x128x128xbf16> to vector<128x128xbf16>
    %c2 = arith.constant 2 : index
    %c0_6 = arith.constant 0 : index
    %c0_7 = arith.constant 0 : index
    %5 = vector.load %arg2[%c2, %c0_6, %c0_7] : memref<5x128x128xbf16, #tpu.memory_space<vmem>>, vector<1x128x128xbf16>
    %6 = vector.shape_cast %5 : vector<1x128x128xbf16> to vector<128x128xbf16>
    %c3 = arith.constant 3 : index
    %c0_8 = arith.constant 0 : index
    %c0_9 = arith.constant 0 : index
    %7 = vector.load %arg2[%c3, %c0_8, %c0_9] : memref<5x128x128xbf16, #tpu.memory_space<vmem>>, vector<1x128x128xbf16>
    %8 = vector.shape_cast %7 : vector<1x128x128xbf16> to vector<128x128xbf16>
    %c4 = arith.constant 4 : index
    %c0_10 = arith.constant 0 : index
    %c0_11 = arith.constant 0 : index
    %9 = vector.load %arg2[%c4, %c0_10, %c0_11] : memref<5x128x128xbf16, #tpu.memory_space<vmem>>, vector<1x128x128xbf16>
    %10 = vector.shape_cast %9 : vector<1x128x128xbf16> to vector<128x128xbf16>
    %c0_12 = arith.constant 0 : index
    %c0_13 = arith.constant 0 : index
    %c0_14 = arith.constant 0 : index
    %11 = vector.load %arg1[%c0_12, %c0_13, %c0_14] : memref<2x20x128xbf16, #tpu.memory_space<vmem>>, vector<1x20x128xbf16>
    %12 = vector.shape_cast %11 : vector<1x20x128xbf16> to vector<20x128xbf16>
    %13 = vector.extract_strided_slice %12 {offsets = [0, 0], sizes = [16, 128], strides = [1, 1]} : vector<20x128xbf16> to vector<16x128xbf16>
    %cst = arith.constant dense<0.000000e+00> : vector<16x128xf32>
    %14 = tpu.matmul %13, %2, %cst {dimension_numbers = #tpu.dot_dimension_numbers<[1], [0], [0], [1], [0, 0, 1, 1], [], []>} : vector<16x128xbf16>, vector<128x128xbf16>, vector<16x128xf32> -> vector<16x128xf32>
    %15 = vector.extract_strided_slice %12 {offsets = [1, 0], sizes = [16, 128], strides = [1, 1]} : vector<20x128xbf16> to vector<16x128xbf16>
    %cst_15 = arith.constant dense<0.000000e+00> : vector<16x128xf32>
    %16 = tpu.matmul %15, %4, %cst_15 {dimension_numbers = #tpu.dot_dimension_numbers<[1], [0], [0], [1], [0, 0, 1, 1], [], []>} : vector<16x128xbf16>, vector<128x128xbf16>, vector<16x128xf32> -> vector<16x128xf32>
    %17 = arith.addf %14, %16 : vector<16x128xf32>
    %18 = vector.extract_strided_slice %12 {offsets = [2, 0], sizes = [16, 128], strides = [1, 1]} : vector<20x128xbf16> to vector<16x128xbf16>
    %cst_16 = arith.constant dense<0.000000e+00> : vector<16x128xf32>
    %19 = tpu.matmul %18, %6, %cst_16 {dimension_numbers = #tpu.dot_dimension_numbers<[1], [0], [0], [1], [0, 0, 1, 1], [], []>} : vector<16x128xbf16>, vector<128x128xbf16>, vector<16x128xf32> -> vector<16x128xf32>
    %20 = arith.addf %17, %19 : vector<16x128xf32>
    %21 = vector.extract_strided_slice %12 {offsets = [3, 0], sizes = [16, 128], strides = [1, 1]} : vector<20x128xbf16> to vector<16x128xbf16>
    %cst_17 = arith.constant dense<0.000000e+00> : vector<16x128xf32>
    %22 = tpu.matmul %21, %8, %cst_17 {dimension_numbers = #tpu.dot_dimension_numbers<[1], [0], [0], [1], [0, 0, 1, 1], [], []>} : vector<16x128xbf16>, vector<128x128xbf16>, vector<16x128xf32> -> vector<16x128xf32>
    %23 = arith.addf %20, %22 : vector<16x128xf32>
    %24 = vector.extract_strided_slice %12 {offsets = [4, 0], sizes = [16, 128], strides = [1, 1]} : vector<20x128xbf16> to vector<16x128xbf16>
    %cst_18 = arith.constant dense<0.000000e+00> : vector<16x128xf32>
    %25 = tpu.matmul %24, %10, %cst_18 {dimension_numbers = #tpu.dot_dimension_numbers<[1], [0], [0], [1], [0, 0, 1, 1], [], []>} : vector<16x128xbf16>, vector<128x128xbf16>, vector<16x128xf32> -> vector<16x128xf32>
    %26 = arith.addf %23, %25 : vector<16x128xf32>
    %27 = vector.broadcast %0 : vector<1x128xf32> to vector<16x128xf32>
    %28 = arith.addf %26, %27 : vector<16x128xf32>
    %cst_19 = arith.constant 0.000000e+00 : f32
    %29 = vector.broadcast %cst_19 : f32 to vector<16x128xf32>
    %30 = arith.maximumf %28, %29 : vector<16x128xf32>
    %c0_20 = arith.constant 0 : index
    %c0_21 = arith.constant 0 : index
    %c0_22 = arith.constant 0 : index
    %31 = vector.load %arg4[%c0_20, %c0_21, %c0_22] : memref<2x16x128xf32, #tpu.memory_space<vmem>>, vector<1x16x128xf32>
    %32 = vector.shape_cast %31 : vector<1x16x128xf32> to vector<16x128xf32>
    %33 = vector.shape_cast %30 : vector<16x128xf32> to vector<1x16x128xf32>
    tpu.vector_store %arg4[%c0_20, %c0_21, %c0_22], %33 {strides = array<i32>} : memref<2x16x128xf32, #tpu.memory_space<vmem>>, vector<1x16x128xf32>,
    %c1_23 = arith.constant 1 : index
    %c0_24 = arith.constant 0 : index
    %c0_25 = arith.constant 0 : index
    %34 = vector.load %arg1[%c1_23, %c0_24, %c0_25] : memref<2x20x128xbf16, #tpu.memory_space<vmem>>, vector<1x20x128xbf16>
    %35 = vector.shape_cast %34 : vector<1x20x128xbf16> to vector<20x128xbf16>
    %36 = vector.extract_strided_slice %35 {offsets = [0, 0], sizes = [16, 128], strides = [1, 1]} : vector<20x128xbf16> to vector<16x128xbf16>
    %cst_26 = arith.constant dense<0.000000e+00> : vector<16x128xf32>
    %37 = tpu.matmul %36, %2, %cst_26 {dimension_numbers = #tpu.dot_dimension_numbers<[1], [0], [0], [1], [0, 0, 1, 1], [], []>} : vector<16x128xbf16>, vector<128x128xbf16>, vector<16x128xf32> -> vector<16x128xf32>
    %38 = vector.extract_strided_slice %35 {offsets = [1, 0], sizes = [16, 128], strides = [1, 1]} : vector<20x128xbf16> to vector<16x128xbf16>
    %cst_27 = arith.constant dense<0.000000e+00> : vector<16x128xf32>
    %39 = tpu.matmul %38, %4, %cst_27 {dimension_numbers = #tpu.dot_dimension_numbers<[1], [0], [0], [1], [0, 0, 1, 1], [], []>} : vector<16x128xbf16>, vector<128x128xbf16>, vector<16x128xf32> -> vector<16x128xf32>
    %40 = arith.addf %37, %39 : vector<16x128xf32>
    %41 = vector.extract_strided_slice %35 {offsets = [2, 0], sizes = [16, 128], strides = [1, 1]} : vector<20x128xbf16> to vector<16x128xbf16>
    %cst_28 = arith.constant dense<0.000000e+00> : vector<16x128xf32>
    %42 = tpu.matmul %41, %6, %cst_28 {dimension_numbers = #tpu.dot_dimension_numbers<[1], [0], [0], [1], [0, 0, 1, 1], [], []>} : vector<16x128xbf16>, vector<128x128xbf16>, vector<16x128xf32> -> vector<16x128xf32>
    %43 = arith.addf %40, %42 : vector<16x128xf32>
    %44 = vector.extract_strided_slice %35 {offsets = [3, 0], sizes = [16, 128], strides = [1, 1]} : vector<20x128xbf16> to vector<16x128xbf16>
    %cst_29 = arith.constant dense<0.000000e+00> : vector<16x128xf32>
    %45 = tpu.matmul %44, %8, %cst_29 {dimension_numbers = #tpu.dot_dimension_numbers<[1], [0], [0], [1], [0, 0, 1, 1], [], []>} : vector<16x128xbf16>, vector<128x128xbf16>, vector<16x128xf32> -> vector<16x128xf32>
    %46 = arith.addf %43, %45 : vector<16x128xf32>
    %47 = vector.extract_strided_slice %35 {offsets = [4, 0], sizes = [16, 128], strides = [1, 1]} : vector<20x128xbf16> to vector<16x128xbf16>
    %cst_30 = arith.constant dense<0.000000e+00> : vector<16x128xf32>
    %48 = tpu.matmul %47, %10, %cst_30 {dimension_numbers = #tpu.dot_dimension_numbers<[1], [0], [0], [1], [0, 0, 1, 1], [], []>} : vector<16x128xbf16>, vector<128x128xbf16>, vector<16x128xf32> -> vector<16x128xf32>
    %49 = arith.addf %46, %48 : vector<16x128xf32>
    %50 = vector.broadcast %0 : vector<1x128xf32> to vector<16x128xf32>
    %51 = arith.addf %49, %50 : vector<16x128xf32>
    %cst_31 = arith.constant 0.000000e+00 : f32
    %52 = vector.broadcast %cst_31 : f32 to vector<16x128xf32>
    %53 = arith.maximumf %51, %52 : vector<16x128xf32>
    %c1_32 = arith.constant 1 : index
    %c0_33 = arith.constant 0 : index
    %c0_34 = arith.constant 0 : index
    %54 = vector.load %arg4[%c1_32, %c0_33, %c0_34] : memref<2x16x128xf32, #tpu.memory_space<vmem>>, vector<1x16x128xf32>
    %55 = vector.shape_cast %54 : vector<1x16x128xf32> to vector<16x128xf32>
    %56 = vector.shape_cast %53 : vector<16x128xf32> to vector<1x16x128xf32>
    tpu.vector_store %arg4[%c1_32, %c0_33, %c0_34], %56 {strides = array<i32>} : memref<2x16x128xf32, #tpu.memory_space<vmem>>, vector<1x16x128xf32>,
    return
  }
  func.func @transform_0(%arg0: i32) -> (i32, i32, i32) {
    %c0_i32 = arith.constant 0 : i32
    %c0_i32_0 = arith.constant 0 : i32
    %c0_i32_1 = arith.constant 0 : i32
    return %arg0, %c0_i32, %c0_i32_0 : i32, i32, i32
  }
  func.func @transform_1(%arg0: i32) -> (i32, i32, i32) {
    %c0_i32 = arith.constant 0 : i32
    %c0_i32_0 = arith.constant 0 : i32
    %c0_i32_1 = arith.constant 0 : i32
    %c0_i32_2 = arith.constant 0 : i32
    return %c0_i32, %c0_i32_0, %c0_i32_1 : i32, i32, i32
  }
  func.func @transform_2(%arg0: i32) -> (i32, i32) {
    %c0_i32 = arith.constant 0 : i32
    %c0_i32_0 = arith.constant 0 : i32
    %c0_i32_1 = arith.constant 0 : i32
    return %c0_i32, %c0_i32_0 : i32, i32
  }
  func.func @transform_3(%arg0: i32) -> (i32, i32, i32) {
    %c0_i32 = arith.constant 0 : i32
    %c0_i32_0 = arith.constant 0 : i32
    %c0_i32_1 = arith.constant 0 : i32
    return %arg0, %c0_i32, %c0_i32_0 : i32, i32, i32
  }
}

</mosaic_0001>

<llo_original>
// kernel: tpu_custom_call.1
$region0: #{tpu_custom_call.1}
  #allocation0 [shape = 'u32[]', space=smem, size = 0x4, offset = 0x4, fixed_abs, tag = 'smem constant byte address 0x4 - core index']
  #allocation1 [shape = 'u32[144,128]{1,0:T(1,128)}', space=vmem, size = 0x12000, scoped, tag = 'internal scratch']
  %s0 = inlined_call_operand.vmem [shape: bf16[2,20,128], index: 0, kind: input, shape index: {}]
  %s1 = inlined_call_operand.hbm [shape: bf16[5,128,128], index: 1, kind: input, shape index: {}]
  %s2 = inlined_call_operand.vmem [shape: f32[1,128], index: 2, kind: input, shape index: {}]
  %s3 = inlined_call_operand.hbm [shape: f32[2,16,128], index: 3, kind: output, shape index: {}]
  %s4 = sld [smem:[#allocation0]]
  $region26: #{tpu_custom_call.1} parent=0
    _
  %s6 = ssub.s32 1, %s4
  %s7 = scalar_select 0, %s6, %s4
  $region1: #{tpu_custom_call.1} parent=0
    #allocation2 [shape = 'u8[163840]{0}', space=vmem, size = 0x28000, scoped, tag = 'input window, operand 1, single buffered']
    #allocation3 [shape = 's32[1]{0}', space=sflag, size = 0x4, scoped, tag = 'scoped memory for tpu_custom_call.1']
    #allocation4 [shape = 's32[1]{0}', space=sflag, size = 0x4, scoped, tag = 'scoped memory for tpu_custom_call.1']
    #allocation5 [shape = 'u8[16384]{0}', space=vmem, size = 0x4000, scoped, tag = 'output window, operand 0, single buffered']
    %8 = vsyncpa [#allocation3], 0
    %9 = vsyncpa [#allocation4], 0
    // Predicated region
    $region2: #{tpu_custom_call.1} parent=1 // pred_check
      _
    $region3: #{tpu_custom_call.1} parent=1 // pred_check_branch
      %11 = sbr.rel (0) target = $region5
    $region4: #{tpu_custom_call.1} parent=1 // pred_region
      _
    $region5: #{tpu_custom_call.1} parent=1 // pred_fallthru
      _
    // Predicated region
    $region6: #{tpu_custom_call.1} parent=1 // pred_check
      _
    $region7: #{tpu_custom_call.1} parent=1 // pred_check_branch
      %13 = sbr.rel (0) target = $region9
    $region8: #{tpu_custom_call.1} parent=1 // pred_region
      %s15 = ssub.s32 5120, 5120
      %16 = vsyncadd [#allocation3], %s15
      %s17 = sshll.u32 [#allocation2], 4
      %s18 = int_to_ptr.vmem [resolvable:$true] %s17
      %23 = dma.hbm_to_vmem [thread:$0]  %s1, 5120, %s18, [#allocation3], 64, 64, 4
    $region9: #{tpu_custom_call.1} parent=1 // pred_fallthru
      _
    // Predicated region
    $region10: #{tpu_custom_call.1} parent=1 // pred_check
      _
    $region11: #{tpu_custom_call.1} parent=1 // pred_check_branch
      %25 = sbr.rel (0) target = $region13
    $region12: #{tpu_custom_call.1} parent=1 // pred_region
      _
    $region13: #{tpu_custom_call.1} parent=1 // pred_fallthru
      _
    // Predicated region
    $region14: #{tpu_custom_call.1} parent=1 // pred_check
      _
    $region15: #{tpu_custom_call.1} parent=1 // pred_check_branch
      %27 = sbr.rel (0) target = $region17
    $region16: #{tpu_custom_call.1} parent=1 // pred_region
      %28 = dma.done [#allocation3], 5120
    $region17: #{tpu_custom_call.1} parent=1 // pred_fallthru
      _
    %v30 = vld [vmem:[%s2] sm:$0x1]
    %v31 = vld [vmem:[#allocation2] sm:$0xf]
    %v32 = vld [vmem:[#allocation2 + $0x4] sm:$0xf]
    %v33 = vld [vmem:[#allocation2 + $0x8] sm:$0xf]
    %v34 = vld [vmem:[#allocation2 + $0xc] sm:$0xf]
    %v35 = vld [vmem:[#allocation2 + $0x10] sm:$0xf]
    %v36 = vld [vmem:[#allocation2 + $0x14] sm:$0xf]
    %v37 = vld [vmem:[#allocation2 + $0x18] sm:$0xf]
    %v38 = vld [vmem:[#allocation2 + $0x1c] sm:$0xf]
    %v39 = vld [vmem:[#allocation2 + $0x20] sm:$0xf]
    %v40 = vld [vmem:[#allocation2 + $0x24] sm:$0xf]
    %v41 = vld [vmem:[#allocation2 + $0x28] sm:$0xf]
    %v42 = vld [vmem:[#allocation2 + $0x2c] sm:$0xf]
    %v43 = vld [vmem:[#allocation2 + $0x30] sm:$0xf]
    %v44 = vld [vmem:[#allocation2 + $0x34] sm:$0xf]
    %v45 = vld [vmem:[#allocation2 + $0x38] sm:$0xf]
    %v46 = vld [vmem:[#allocation2 + $0x3c] sm:$0xf]
    %s47 = scalar_lea.vmem [#allocation2], 64
    %v48 = vld [vmem:[%s47] sm:$0xf]
    %v49 = vld [vmem:[%s47 + $0x4] sm:$0xf]
    %v50 = vld [vmem:[%s47 + $0x8] sm:$0xf]
    %v51 = vld [vmem:[%s47 + $0xc] sm:$0xf]
    %v52 = vld [vmem:[%s47 + $0x10] sm:$0xf]
    %v53 = vld [vmem:[%s47 + $0x14] sm:$0xf]
    %v54 = vld [vmem:[%s47 + $0x18] sm:$0xf]
    %v55 = vld [vmem:[%s47 + $0x1c] sm:$0xf]
    %v56 = vld [vmem:[%s47 + $0x20] sm:$0xf]
    %v57 = vld [vmem:[%s47 + $0x24] sm:$0xf]
    %v58 = vld [vmem:[%s47 + $0x28] sm:$0xf]
    %v59 = vld [vmem:[%s47 + $0x2c] sm:$0xf]
    %v60 = vld [vmem:[%s47 + $0x30] sm:$0xf]
    %v61 = vld [vmem:[%s47 + $0x34] sm:$0xf]
    %v62 = vld [vmem:[%s47 + $0x38] sm:$0xf]
    %v63 = vld [vmem:[%s47 + $0x3c] sm:$0xf]
    %s64 = scalar_lea.vmem [#allocation2], 128
    %v65 = vld [vmem:[%s64] sm:$0xf]
    %v66 = vld [vmem:[%s64 + $0x4] sm:$0xf]
    %v67 = vld [vmem:[%s64 + $0x8] sm:$0xf]
    %v68 = vld [vmem:[%s64 + $0xc] sm:$0xf]
    %v69 = vld [vmem:[%s64 + $0x10] sm:$0xf]
    %v70 = vld [vmem:[%s64 + $0x14] sm:$0xf]
    %v71 = vld [vmem:[%s64 + $0x18] sm:$0xf]
    %v72 = vld [vmem:[%s64 + $0x1c] sm:$0xf]
    %v73 = vld [vmem:[%s64 + $0x20] sm:$0xf]
    %v74 = vld [vmem:[%s64 + $0x24] sm:$0xf]
    %v75 = vld [vmem:[%s64 + $0x28] sm:$0xf]
    %v76 = vld [vmem:[%s64 + $0x2c] sm:$0xf]
    %v77 = vld [vmem:[%s64 + $0x30] sm:$0xf]
    %v78 = vld [vmem:[%s64 + $0x34] sm:$0xf]
    %v79 = vld [vmem:[%s64 + $0x38] sm:$0xf]
    %v80 = vld [vmem:[%s64 + $0x3c] sm:$0xf]
    %s81 = scalar_lea.vmem [#allocation2], 192
    %v82 = vld [vmem:[%s81] sm:$0xf]
    %v83 = vld [vmem:[%s81 + $0x4] sm:$0xf]
    %v84 = vld [vmem:[%s81 + $0x8] sm:$0xf]
    %v85 = vld [vmem:[%s81 + $0xc] sm:$0xf]
    %v86 = vld [vmem:[%s81 + $0x10] sm:$0xf]
    %v87 = vld [vmem:[%s81 + $0x14] sm:$0xf]
    %v88 = vld [vmem:[%s81 + $0x18] sm:$0xf]
    %v89 = vld [vmem:[%s81 + $0x1c] sm:$0xf]
    %v90 = vld [vmem:[%s81 + $0x20] sm:$0xf]
    %v91 = vld [vmem:[%s81 + $0x24] sm:$0xf]
    %v92 = vld [vmem:[%s81 + $0x28] sm:$0xf]
    %v93 = vld [vmem:[%s81 + $0x2c] sm:$0xf]
    %v94 = vld [vmem:[%s81 + $0x30] sm:$0xf]
    %v95 = vld [vmem:[%s81 + $0x34] sm:$0xf]
    %v96 = vld [vmem:[%s81 + $0x38] sm:$0xf]
    %v97 = vld [vmem:[%s81 + $0x3c] sm:$0xf]
    %s98 = scalar_lea.vmem [#allocation2], 256
    %v99 = vld [vmem:[%s98] sm:$0xf]
    %v100 = vld [vmem:[%s98 + $0x4] sm:$0xf]
    %v101 = vld [vmem:[%s98 + $0x8] sm:$0xf]
    %v102 = vld [vmem:[%s98 + $0xc] sm:$0xf]
    %v103 = vld [vmem:[%s98 + $0x10] sm:$0xf]
    %v104 = vld [vmem:[%s98 + $0x14] sm:$0xf]
    %v105 = vld [vmem:[%s98 + $0x18] sm:$0xf]
    %v106 = vld [vmem:[%s98 + $0x1c] sm:$0xf]
    %v107 = vld [vmem:[%s98 + $0x20] sm:$0xf]
    %v108 = vld [vmem:[%s98 + $0x24] sm:$0xf]
    %v109 = vld [vmem:[%s98 + $0x28] sm:$0xf]
    %v110 = vld [vmem:[%s98 + $0x2c] sm:$0xf]
    %v111 = vld [vmem:[%s98 + $0x30] sm:$0xf]
    %v112 = vld [vmem:[%s98 + $0x34] sm:$0xf]
    %v113 = vld [vmem:[%s98 + $0x38] sm:$0xf]
    %v114 = vld [vmem:[%s98 + $0x3c] sm:$0xf]
    %v115 = vld [vmem:[%s0] sm:$0xf]
    %v116 = vld [vmem:[%s0 + $0x4] sm:$0xf]
    %v117 = vld [vmem:[%s0 + $0x8] sm:$0x3]
    %v121 = vunpack.c.l.b16 %v115
    %v122 = vunpack.c.l.b16 %v116
    %v123 = vunpack.c.l.b16 %v117
    %v124 = vpack.c.b16 %v122, %v121
    %v125 = vpack.c.b16 %v123, %v123
    %vm126 = vsmask.f32 7424
    %v128 = vshrl.u32 %v124, 16
    %v130 = vshll.u32 %v124, 16
    %v132 = vrot.slane %v130, 1
    %v133 = vor.u32 %v128, %v132
    %v135 = vshll.u32 %v125, 16
    %v137 = vrot.slane %v135, 1
    %v138 = vsel %vm126, %v133, %v137
    %v156 = vunpack.c.l.b16 %v48
    %v157 = vunpack.c.l.b16 %v49
    %v158 = vunpack.c.l.b16 %v50
    %v159 = vunpack.c.l.b16 %v51
    %v160 = vunpack.c.l.b16 %v52
    %v161 = vunpack.c.l.b16 %v53
    %v162 = vunpack.c.l.b16 %v54
    %v163 = vunpack.c.l.b16 %v55
    %v164 = vunpack.c.l.b16 %v56
    %v165 = vunpack.c.l.b16 %v57
    %v166 = vunpack.c.l.b16 %v58
    %v167 = vunpack.c.l.b16 %v59
    %v168 = vunpack.c.l.b16 %v60
    %v169 = vunpack.c.l.b16 %v61
    %v170 = vunpack.c.l.b16 %v62
    %v171 = vunpack.c.l.b16 %v63
    %v172 = vpack.c.b16 %v157, %v156
    %v173 = vpack.c.b16 %v159, %v158
    %v174 = vpack.c.b16 %v161, %v160
    %v175 = vpack.c.b16 %v163, %v162
    %v176 = vpack.c.b16 %v165, %v164
    %v177 = vpack.c.b16 %v167, %v166
    %v178 = vpack.c.b16 %v169, %v168
    %v179 = vpack.c.b16 %v171, %v170
    %188 = vmatprep.subr.bf16.mxu0 0
    %189 = vmatpush1.bf16.msra.mxu0 %v172
    %190 = vmatprep.subr.bf16.mxu0 0
    %191 = vmatpush1.bf16.msra.mxu0 %v173
    %192 = vmatprep.subr.bf16.mxu0 0
    %193 = vmatpush1.bf16.msra.mxu0 %v174
    %194 = vmatprep.subr.bf16.mxu0 0
    %195 = vmatpush1.bf16.msra.mxu0 %v175
    %196 = vmatprep.subr.bf16.mxu0 0
    %197 = vmatpush1.bf16.msra.mxu0 %v176
    %198 = vmatprep.subr.bf16.mxu0 0
    %199 = vmatpush1.bf16.msra.mxu0 %v177
    %200 = vmatprep.subr.bf16.mxu0 0
    %201 = vmatpush1.bf16.msra.mxu0 %v178
    %202 = vmatprep.subr.bf16.mxu0 0
    %203 = vmatpush1.bf16.msra.mxu0 %v179
    %204 = vmatprep.subr.bf16.mxu0 0
    %205 = vmatpush1.bf16.msra.mxu0 0
    %206 = vmatprep.subr.bf16.mxu0 0
    %207 = vmatpush1.bf16.msra.mxu0 0
    %208 = vmatprep.subr.bf16.mxu0 0
    %209 = vmatpush1.bf16.msra.mxu0 0
    %210 = vmatprep.subr.bf16.mxu0 0
    %211 = vmatpush1.bf16.msra.mxu0 0
    %212 = vmatprep.subr.bf16.mxu0 0
    %213 = vmatpush1.bf16.msra.mxu0 0
    %214 = vmatprep.subr.bf16.mxu0 0
    %215 = vmatpush1.bf16.msra.mxu0 0
    %216 = vmatprep.subr.bf16.mxu0 0
    %217 = vmatpush1.bf16.msra.mxu0 0
    %218 = vmatprep.subr.bf16.mxu0 0
    %219 = vmatpush1.bf16.msra.mxu0 0
    %220 = vmatprep.mubr.bf16.mxu0 0
    %221 = vmatmul.mubr.bf16.gmra.mrb[0].mxu0 %v138
    %v222 = vpop.f32.mrb[0].mxu0
    %v223 = vadd.f32 0.0, %v222
    %v224 = vpop.f32.mrb[0].mxu0
    %v225 = vpop.f32.mrb[0].mxu0
    %v226 = vadd.f32 0.0, %v225
    %v227 = vpop.f32.mrb[0].mxu0
    %228 = vdwg.mxu0
    %v246 = vunpack.c.l.b16 %v31
    %v247 = vunpack.c.l.b16 %v32
    %v248 = vunpack.c.l.b16 %v33
    %v249 = vunpack.c.l.b16 %v34
    %v250 = vunpack.c.l.b16 %v35
    %v251 = vunpack.c.l.b16 %v36
    %v252 = vunpack.c.l.b16 %v37
    %v253 = vunpack.c.l.b16 %v38
    %v254 = vunpack.c.l.b16 %v39
    %v255 = vunpack.c.l.b16 %v40
    %v256 = vunpack.c.l.b16 %v41
    %v257 = vunpack.c.l.b16 %v42
    %v258 = vunpack.c.l.b16 %v43
    %v259 = vunpack.c.l.b16 %v44
    %v260 = vunpack.c.l.b16 %v45
    %v261 = vunpack.c.l.b16 %v46
    %v262 = vpack.c.b16 %v247, %v246
    %v263 = vpack.c.b16 %v249, %v248
    %v264 = vpack.c.b16 %v251, %v250
    %v265 = vpack.c.b16 %v253, %v252
    %v266 = vpack.c.b16 %v255, %v254
    %v267 = vpack.c.b16 %v257, %v256
    %v268 = vpack.c.b16 %v259, %v258
    %v269 = vpack.c.b16 %v261, %v260
    %278 = vmatprep.subr.bf16.mxu0 0
    %279 = vmatpush1.bf16.msra.mxu0 %v262
    %280 = vmatprep.subr.bf16.mxu0 0
    %281 = vmatpush1.bf16.msra.mxu0 %v263
    %282 = vmatprep.subr.bf16.mxu0 0
    %283 = vmatpush1.bf16.msra.mxu0 %v264
    %284 = vmatprep.subr.bf16.mxu0 0
    %285 = vmatpush1.bf16.msra.mxu0 %v265
    %286 = vmatprep.subr.bf16.mxu0 0
    %287 = vmatpush1.bf16.msra.mxu0 %v266
    %288 = vmatprep.subr.bf16.mxu0 0
    %289 = vmatpush1.bf16.msra.mxu0 %v267
    %290 = vmatprep.subr.bf16.mxu0 0
    %291 = vmatpush1.bf16.msra.mxu0 %v268
    %292 = vmatprep.subr.bf16.mxu0 0
    %293 = vmatpush1.bf16.msra.mxu0 %v269
    %294 = vmatprep.subr.bf16.mxu0 0
    %295 = vmatpush1.bf16.msra.mxu0 0
    %296 = vmatprep.subr.bf16.mxu0 0
    %297 = vmatpush1.bf16.msra.mxu0 0
    %298 = vmatprep.subr.bf16.mxu0 0
    %299 = vmatpush1.bf16.msra.mxu0 0
    %300 = vmatprep.subr.bf16.mxu0 0
    %301 = vmatpush1.bf16.msra.mxu0 0
    %302 = vmatprep.subr.bf16.mxu0 0
    %303 = vmatpush1.bf16.msra.mxu0 0
    %304 = vmatprep.subr.bf16.mxu0 0
    %305 = vmatpush1.bf16.msra.mxu0 0
    %306 = vmatprep.subr.bf16.mxu0 0
    %307 = vmatpush1.bf16.msra.mxu0 0
    %308 = vmatprep.subr.bf16.mxu0 0
    %309 = vmatpush1.bf16.msra.mxu0 0
    %310 = vmatprep.mubr.bf16.mxu0 0
    %311 = vmatmul.mubr.bf16.gmra.mrb[0].mxu0 %v124
    %v312 = vpop.f32.mrb[0].mxu0
    %v313 = vadd.f32 %v223, %v312
    %v314 = vpop.f32.mrb[0].mxu0
    %v315 = vpop.f32.mrb[0].mxu0
    %v316 = vadd.f32 %v226, %v315
    %v317 = vpop.f32.mrb[0].mxu0
    %318 = vdwg.mxu0
    %vm319 = vcmask 1046528
    %v320 = vrot.slane %v124, 1
    %v321 = vrot.slane %v125, 1
    %v322 = vsel %vm319, %v320, %v321
    %v340 = vunpack.c.l.b16 %v65
    %v341 = vunpack.c.l.b16 %v66
    %v342 = vunpack.c.l.b16 %v67
    %v343 = vunpack.c.l.b16 %v68
    %v344 = vunpack.c.l.b16 %v69
    %v345 = vunpack.c.l.b16 %v70
    %v346 = vunpack.c.l.b16 %v71
    %v347 = vunpack.c.l.b16 %v72
    %v348 = vunpack.c.l.b16 %v73
    %v349 = vunpack.c.l.b16 %v74
    %v350 = vunpack.c.l.b16 %v75
    %v351 = vunpack.c.l.b16 %v76
    %v352 = vunpack.c.l.b16 %v77
    %v353 = vunpack.c.l.b16 %v78
    %v354 = vunpack.c.l.b16 %v79
    %v355 = vunpack.c.l.b16 %v80
    %v356 = vpack.c.b16 %v341, %v340
    %v357 = vpack.c.b16 %v343, %v342
    %v358 = vpack.c.b16 %v345, %v344
    %v359 = vpack.c.b16 %v347, %v346
    %v360 = vpack.c.b16 %v349, %v348
    %v361 = vpack.c.b16 %v351, %v350
    %v362 = vpack.c.b16 %v353, %v352
    %v363 = vpack.c.b16 %v355, %v354
    %372 = vmatprep.subr.bf16.mxu0 0
    %373 = vmatpush1.bf16.msra.mxu0 %v356
    %374 = vmatprep.subr.bf16.mxu0 0
    %375 = vmatpush1.bf16.msra.mxu0 %v357
    %376 = vmatprep.subr.bf16.mxu0 0
    %377 = vmatpush1.bf16.msra.mxu0 %v358
    %378 = vmatprep.subr.bf16.mxu0 0
    %379 = vmatpush1.bf16.msra.mxu0 %v359
    %380 = vmatprep.subr.bf16.mxu0 0
    %381 = vmatpush1.bf16.msra.mxu0 %v360
    %382 = vmatprep.subr.bf16.mxu0 0
    %383 = vmatpush1.bf16.msra.mxu0 %v361
    %384 = vmatprep.subr.bf16.mxu0 0
    %385 = vmatpush1.bf16.msra.mxu0 %v362
    %386 = vmatprep.subr.bf16.mxu0 0
    %387 = vmatpush1.bf16.msra.mxu0 %v363
    %388 = vmatprep.subr.bf16.mxu0 0
    %389 = vmatpush1.bf16.msra.mxu0 0
    %390 = vmatprep.subr.bf16.mxu0 0
    %391 = vmatpush1.bf16.msra.mxu0 0
    %392 = vmatprep.subr.bf16.mxu0 0
    %393 = vmatpush1.bf16.msra.mxu0 0
    %394 = vmatprep.subr.bf16.mxu0 0
    %395 = vmatpush1.bf16.msra.mxu0 0
    %396 = vmatprep.subr.bf16.mxu0 0
    %397 = vmatpush1.bf16.msra.mxu0 0
    %398 = vmatprep.subr.bf16.mxu0 0
    %399 = vmatpush1.bf16.msra.mxu0 0
    %400 = vmatprep.subr.bf16.mxu0 0
    %401 = vmatpush1.bf16.msra.mxu0 0
    %402 = vmatprep.subr.bf16.mxu0 0
    %403 = vmatpush1.bf16.msra.mxu0 0
    %404 = vmatprep.mubr.bf16.mxu0 0
    %405 = vmatmul.mubr.bf16.gmra.mrb[0].mxu0 %v322
    %v406 = vpop.f32.mrb[0].mxu0
    %v407 = vadd.f32 0.0, %v406
    %v408 = vpop.f32.mrb[0].mxu0
    %v409 = vpop.f32.mrb[0].mxu0
    %v410 = vadd.f32 0.0, %v409
    %v411 = vpop.f32.mrb[0].mxu0
    %412 = vdwg.mxu0
    %v413 = vadd.f32 %v313, %v407
    %v414 = vadd.f32 %v316, %v410
    %vm415 = vsmask.f32 6400
    %v416 = vrot.slane %v128, 1
    %v417 = vrot.slane %v130, 2
    %v418 = vor.u32 %v416, %v417
    %v419 = vshrl.u32 %v125, 16
    %v421 = vrot.slane %v419, 1
    %v422 = vrot.slane %v135, 2
    %v423 = vor.u32 %v421, %v422
    %v424 = vsel %vm415, %v418, %v423
    %v442 = vunpack.c.l.b16 %v82
    %v443 = vunpack.c.l.b16 %v83
    %v444 = vunpack.c.l.b16 %v84
    %v445 = vunpack.c.l.b16 %v85
    %v446 = vunpack.c.l.b16 %v86
    %v447 = vunpack.c.l.b16 %v87
    %v448 = vunpack.c.l.b16 %v88
    %v449 = vunpack.c.l.b16 %v89
    %v450 = vunpack.c.l.b16 %v90
    %v451 = vunpack.c.l.b16 %v91
    %v452 = vunpack.c.l.b16 %v92
    %v453 = vunpack.c.l.b16 %v93
    %v454 = vunpack.c.l.b16 %v94
    %v455 = vunpack.c.l.b16 %v95
    %v456 = vunpack.c.l.b16 %v96
    %v457 = vunpack.c.l.b16 %v97
    %v458 = vpack.c.b16 %v443, %v442
    %v459 = vpack.c.b16 %v445, %v444
    %v460 = vpack.c.b16 %v447, %v446
    %v461 = vpack.c.b16 %v449, %v448
    %v462 = vpack.c.b16 %v451, %v450
    %v463 = vpack.c.b16 %v453, %v452
    %v464 = vpack.c.b16 %v455, %v454
    %v465 = vpack.c.b16 %v457, %v456
    %474 = vmatprep.subr.bf16.mxu0 0
    %475 = vmatpush1.bf16.msra.mxu0 %v458
    %476 = vmatprep.subr.bf16.mxu0 0
    %477 = vmatpush1.bf16.msra.mxu0 %v459
    %478 = vmatprep.subr.bf16.mxu0 0
    %479 = vmatpush1.bf16.msra.mxu0 %v460
    %480 = vmatprep.subr.bf16.mxu0 0
    %481 = vmatpush1.bf16.msra.mxu0 %v461
    %482 = vmatprep.subr.bf16.mxu0 0
    %483 = vmatpush1.bf16.msra.mxu0 %v462
    %484 = vmatprep.subr.bf16.mxu0 0
    %485 = vmatpush1.bf16.msra.mxu0 %v463
    %486 = vmatprep.subr.bf16.mxu0 0
    %487 = vmatpush1.bf16.msra.mxu0 %v464
    %488 = vmatprep.subr.bf16.mxu0 0
    %489 = vmatpush1.bf16.msra.mxu0 %v465
    %490 = vmatprep.subr.bf16.mxu0 0
    %491 = vmatpush1.bf16.msra.mxu0 0
    %492 = vmatprep.subr.bf16.mxu0 0
    %493 = vmatpush1.bf16.msra.mxu0 0
    %494 = vmatprep.subr.bf16.mxu0 0
    %495 = vmatpush1.bf16.msra.mxu0 0
    %496 = vmatprep.subr.bf16.mxu0 0
    %497 = vmatpush1.bf16.msra.mxu0 0
    %498 = vmatprep.subr.bf16.mxu0 0
    %499 = vmatpush1.bf16.msra.mxu0 0
    %500 = vmatprep.subr.bf16.mxu0 0
    %501 = vmatpush1.bf16.msra.mxu0 0
    %502 = vmatprep.subr.bf16.mxu0 0
    %503 = vmatpush1.bf16.msra.mxu0 0
    %504 = vmatprep.subr.bf16.mxu0 0
    %505 = vmatpush1.bf16.msra.mxu0 0
    %506 = vmatprep.mubr.bf16.mxu0 0
    %507 = vmatmul.mubr.bf16.gmra.mrb[0].mxu0 %v424
    %v508 = vpop.f32.mrb[0].mxu0
    %v509 = vadd.f32 0.0, %v508
    %v510 = vpop.f32.mrb[0].mxu0
    %v511 = vpop.f32.mrb[0].mxu0
    %v512 = vadd.f32 0.0, %v511
    %v513 = vpop.f32.mrb[0].mxu0
    %514 = vdwg.mxu0
    %v515 = vadd.f32 %v413, %v509
    %v516 = vadd.f32 %v414, %v512
    %vm517 = vcmask 1045504
    %v518 = vrot.slane %v124, 2
    %v519 = vrot.slane %v125, 2
    %v520 = vsel %vm517, %v518, %v519
    %v538 = vunpack.c.l.b16 %v99
    %v539 = vunpack.c.l.b16 %v100
    %v540 = vunpack.c.l.b16 %v101
    %v541 = vunpack.c.l.b16 %v102
    %v542 = vunpack.c.l.b16 %v103
    %v543 = vunpack.c.l.b16 %v104
    %v544 = vunpack.c.l.b16 %v105
    %v545 = vunpack.c.l.b16 %v106
    %v546 = vunpack.c.l.b16 %v107
    %v547 = vunpack.c.l.b16 %v108
    %v548 = vunpack.c.l.b16 %v109
    %v549 = vunpack.c.l.b16 %v110
    %v550 = vunpack.c.l.b16 %v111
    %v551 = vunpack.c.l.b16 %v112
    %v552 = vunpack.c.l.b16 %v113
    %v553 = vunpack.c.l.b16 %v114
    %v554 = vpack.c.b16 %v539, %v538
    %v555 = vpack.c.b16 %v541, %v540
    %v556 = vpack.c.b16 %v543, %v542
    %v557 = vpack.c.b16 %v545, %v544
    %v558 = vpack.c.b16 %v547, %v546
    %v559 = vpack.c.b16 %v549, %v548
    %v560 = vpack.c.b16 %v551, %v550
    %v561 = vpack.c.b16 %v553, %v552
    %570 = vmatprep.subr.bf16.mxu0 0
    %571 = vmatpush1.bf16.msra.mxu0 %v554
    %572 = vmatprep.subr.bf16.mxu0 0
    %573 = vmatpush1.bf16.msra.mxu0 %v555
    %574 = vmatprep.subr.bf16.mxu0 0
    %575 = vmatpush1.bf16.msra.mxu0 %v556
    %576 = vmatprep.subr.bf16.mxu0 0
    %577 = vmatpush1.bf16.msra.mxu0 %v557
    %578 = vmatprep.subr.bf16.mxu0 0
    %579 = vmatpush1.bf16.msra.mxu0 %v558
    %580 = vmatprep.subr.bf16.mxu0 0
    %581 = vmatpush1.bf16.msra.mxu0 %v559
    %582 = vmatprep.subr.bf16.mxu0 0
    %583 = vmatpush1.bf16.msra.mxu0 %v560
    %584 = vmatprep.subr.bf16.mxu0 0
    %585 = vmatpush1.bf16.msra.mxu0 %v561
    %586 = vmatprep.subr.bf16.mxu0 0
    %587 = vmatpush1.bf16.msra.mxu0 0
    %588 = vmatprep.subr.bf16.mxu0 0
    %589 = vmatpush1.bf16.msra.mxu0 0
    %590 = vmatprep.subr.bf16.mxu0 0
    %591 = vmatpush1.bf16.msra.mxu0 0
    %592 = vmatprep.subr.bf16.mxu0 0
    %593 = vmatpush1.bf16.msra.mxu0 0
    %594 = vmatprep.subr.bf16.mxu0 0
    %595 = vmatpush1.bf16.msra.mxu0 0
    %596 = vmatprep.subr.bf16.mxu0 0
    %597 = vmatpush1.bf16.msra.mxu0 0
    %598 = vmatprep.subr.bf16.mxu0 0
    %599 = vmatpush1.bf16.msra.mxu0 0
    %600 = vmatprep.subr.bf16.mxu0 0
    %601 = vmatpush1.bf16.msra.mxu0 0
    %602 = vmatprep.mubr.bf16.mxu0 0
    %603 = vmatmul.mubr.bf16.gmra.mrb[0].mxu0 %v520
    %v604 = vpop.f32.mrb[0].mxu0
    %v605 = vadd.f32 0.0, %v604
    %v606 = vpop.f32.mrb[0].mxu0
    %v607 = vpop.f32.mrb[0].mxu0
    %v608 = vadd.f32 0.0, %v607
    %v609 = vpop.f32.mrb[0].mxu0
    %610 = vdwg.mxu0
    %v611 = vadd.f32 %v515, %v605
    %v612 = vadd.f32 %v516, %v608
    %v614 = vlaneseq
    %v615 = vshrl.u32 %v614, 7
    %v616 = vsub.s32 0, %v615
    %v617 = vrot.slane %v30, %v616
    %v619 = vadd.f32 %v611, %v617
    %v620 = vadd.f32 %v612, %v617
    %v621 = vmax.f32 %v619, 0.0
    %v622 = vmax.f32 %v620, 0.0
    %623 = vst [vmem:[#allocation5] sm:$0xff] %v621
    %624 = vst [vmem:[#allocation5 + $0x8] sm:$0xff] %v622
    %s625 = scalar_lea.vmem %s0, 12
    %v626 = vld [vmem:[%s625] sm:$0xf]
    %v627 = vld [vmem:[%s625 + $0x4] sm:$0xf]
    %v628 = vld [vmem:[%s625 + $0x8] sm:$0x3]
    %v632 = vunpack.c.l.b16 %v626
    %v633 = vunpack.c.l.b16 %v627
    %v634 = vunpack.c.l.b16 %v628
    %v635 = vpack.c.b16 %v633, %v632
    %v636 = vpack.c.b16 %v634, %v634
    %v638 = vshrl.u32 %v635, 16
    %v640 = vshll.u32 %v635, 16
    %v642 = vrot.slane %v640, 1
    %v643 = vor.u32 %v638, %v642
    %v645 = vshll.u32 %v636, 16
    %v647 = vrot.slane %v645, 1
    %v648 = vsel %vm126, %v643, %v647
    %650 = vmatprep.subr.bf16.mxu0 0
    %651 = vmatpush1.bf16.msra.mxu0 %v172
    %652 = vmatprep.subr.bf16.mxu0 0
    %653 = vmatpush1.bf16.msra.mxu0 %v173
    %654 = vmatprep.subr.bf16.mxu0 0
    %655 = vmatpush1.bf16.msra.mxu0 %v174
    %656 = vmatprep.subr.bf16.mxu0 0
    %657 = vmatpush1.bf16.msra.mxu0 %v175
    %658 = vmatprep.subr.bf16.mxu0 0
    %659 = vmatpush1.bf16.msra.mxu0 %v176
    %660 = vmatprep.subr.bf16.mxu0 0
    %661 = vmatpush1.bf16.msra.mxu0 %v177
    %662 = vmatprep.subr.bf16.mxu0 0
    %663 = vmatpush1.bf16.msra.mxu0 %v178
    %664 = vmatprep.subr.bf16.mxu0 0
    %665 = vmatpush1.bf16.msra.mxu0 %v179
    %666 = vmatprep.subr.bf16.mxu0 0
    %667 = vmatpush1.bf16.msra.mxu0 0
    %668 = vmatprep.subr.bf16.mxu0 0
    %669 = vmatpush1.bf16.msra.mxu0 0
    %670 = vmatprep.subr.bf16.mxu0 0
    %671 = vmatpush1.bf16.msra.mxu0 0
    %672 = vmatprep.subr.bf16.mxu0 0
    %673 = vmatpush1.bf16.msra.mxu0 0
    %674 = vmatprep.subr.bf16.mxu0 0
    %675 = vmatpush1.bf16.msra.mxu0 0
    %676 = vmatprep.subr.bf16.mxu0 0
    %677 = vmatpush1.bf16.msra.mxu0 0
    %678 = vmatprep.subr.bf16.mxu0 0
    %679 = vmatpush1.bf16.msra.mxu0 0
    %680 = vmatprep.subr.bf16.mxu0 0
    %681 = vmatpush1.bf16.msra.mxu0 0
    %682 = vmatprep.mubr.bf16.mxu0 0
    %683 = vmatmul.mubr.bf16.gmra.mrb[0].mxu0 %v648
    %v684 = vpop.f32.mrb[0].mxu0
    %v685 = vadd.f32 0.0, %v684
    %v686 = vpop.f32.mrb[0].mxu0
    %v687 = vpop.f32.mrb[0].mxu0
    %v688 = vadd.f32 0.0, %v687
    %v689 = vpop.f32.mrb[0].mxu0
    %690 = vdwg.mxu0
    %692 = vmatprep.subr.bf16.mxu0 0
    %693 = vmatpush1.bf16.msra.mxu0 %v262
    %694 = vmatprep.subr.bf16.mxu0 0
    %695 = vmatpush1.bf16.msra.mxu0 %v263
    %696 = vmatprep.subr.bf16.mxu0 0
    %697 = vmatpush1.bf16.msra.mxu0 %v264
    %698 = vmatprep.subr.bf16.mxu0 0
    %699 = vmatpush1.bf16.msra.mxu0 %v265
    %700 = vmatprep.subr.bf16.mxu0 0
    %701 = vmatpush1.bf16.msra.mxu0 %v266
    %702 = vmatprep.subr.bf16.mxu0 0
    %703 = vmatpush1.bf16.msra.mxu0 %v267
    %704 = vmatprep.subr.bf16.mxu0 0
    %705 = vmatpush1.bf16.msra.mxu0 %v268
    %706 = vmatprep.subr.bf16.mxu0 0
    %707 = vmatpush1.bf16.msra.mxu0 %v269
    %708 = vmatprep.subr.bf16.mxu0 0
    %709 = vmatpush1.bf16.msra.mxu0 0
    %710 = vmatprep.subr.bf16.mxu0 0
    %711 = vmatpush1.bf16.msra.mxu0 0
    %712 = vmatprep.subr.bf16.mxu0 0
    %713 = vmatpush1.bf16.msra.mxu0 0
    %714 = vmatprep.subr.bf16.mxu0 0
    %715 = vmatpush1.bf16.msra.mxu0 0
    %716 = vmatprep.subr.bf16.mxu0 0
    %717 = vmatpush1.bf16.msra.mxu0 0
    %718 = vmatprep.subr.bf16.mxu0 0
    %719 = vmatpush1.bf16.msra.mxu0 0
    %720 = vmatprep.subr.bf16.mxu0 0
    %721 = vmatpush1.bf16.msra.mxu0 0
    %722 = vmatprep.subr.bf16.mxu0 0
    %723 = vmatpush1.bf16.msra.mxu0 0
    %724 = vmatprep.mubr.bf16.mxu0 0
    %725 = vmatmul.mubr.bf16.gmra.mrb[0].mxu0 %v635
    %v726 = vpop.f32.mrb[0].mxu0
    %v727 = vadd.f32 %v685, %v726
    %v728 = vpop.f32.mrb[0].mxu0
    %v729 = vpop.f32.mrb[0].mxu0
    %v730 = vadd.f32 %v688, %v729
    %v731 = vpop.f32.mrb[0].mxu0
    %732 = vdwg.mxu0
    %v733 = vrot.slane %v635, 1
    %v734 = vrot.slane %v636, 1
    %v735 = vsel %vm319, %v733, %v734
    %737 = vmatprep.subr.bf16.mxu0 0
    %738 = vmatpush1.bf16.msra.mxu0 %v356
    %739 = vmatprep.subr.bf16.mxu0 0
    %740 = vmatpush1.bf16.msra.mxu0 %v357
    %741 = vmatprep.subr.bf16.mxu0 0
    %742 = vmatpush1.bf16.msra.mxu0 %v358
    %743 = vmatprep.subr.bf16.mxu0 0
    %744 = vmatpush1.bf16.msra.mxu0 %v359
    %745 = vmatprep.subr.bf16.mxu0 0
    %746 = vmatpush1.bf16.msra.mxu0 %v360
    %747 = vmatprep.subr.bf16.mxu0 0
    %748 = vmatpush1.bf16.msra.mxu0 %v361
    %749 = vmatprep.subr.bf16.mxu0 0
    %750 = vmatpush1.bf16.msra.mxu0 %v362
    %751 = vmatprep.subr.bf16.mxu0 0
    %752 = vmatpush1.bf16.msra.mxu0 %v363
    %753 = vmatprep.subr.bf16.mxu0 0
    %754 = vmatpush1.bf16.msra.mxu0 0
    %755 = vmatprep.subr.bf16.mxu0 0
    %756 = vmatpush1.bf16.msra.mxu0 0
    %757 = vmatprep.subr.bf16.mxu0 0
    %758 = vmatpush1.bf16.msra.mxu0 0
    %759 = vmatprep.subr.bf16.mxu0 0
    %760 = vmatpush1.bf16.msra.mxu0 0
    %761 = vmatprep.subr.bf16.mxu0 0
    %762 = vmatpush1.bf16.msra.mxu0 0
    %763 = vmatprep.subr.bf16.mxu0 0
    %764 = vmatpush1.bf16.msra.mxu0 0
    %765 = vmatprep.subr.bf16.mxu0 0
    %766 = vmatpush1.bf16.msra.mxu0 0
    %767 = vmatprep.subr.bf16.mxu0 0
    %768 = vmatpush1.bf16.msra.mxu0 0
    %769 = vmatprep.mubr.bf16.mxu0 0
    %770 = vmatmul.mubr.bf16.gmra.mrb[0].mxu0 %v735
    %v771 = vpop.f32.mrb[0].mxu0
    %v772 = vadd.f32 0.0, %v771
    %v773 = vpop.f32.mrb[0].mxu0
    %v774 = vpop.f32.mrb[0].mxu0
    %v775 = vadd.f32 0.0, %v774
    %v776 = vpop.f32.mrb[0].mxu0
    %777 = vdwg.mxu0
    %v778 = vadd.f32 %v727, %v772
    %v779 = vadd.f32 %v730, %v775
    %v780 = vrot.slane %v638, 1
    %v781 = vrot.slane %v640, 2
    %v782 = vor.u32 %v780, %v781
    %v783 = vshrl.u32 %v636, 16
    %v785 = vrot.slane %v783, 1
    %v786 = vrot.slane %v645, 2
    %v787 = vor.u32 %v785, %v786
    %v788 = vsel %vm415, %v782, %v787
    %790 = vmatprep.subr.bf16.mxu0 0
    %791 = vmatpush1.bf16.msra.mxu0 %v458
    %792 = vmatprep.subr.bf16.mxu0 0
    %793 = vmatpush1.bf16.msra.mxu0 %v459
    %794 = vmatprep.subr.bf16.mxu0 0
    %795 = vmatpush1.bf16.msra.mxu0 %v460
    %796 = vmatprep.subr.bf16.mxu0 0
    %797 = vmatpush1.bf16.msra.mxu0 %v461
    %798 = vmatprep.subr.bf16.mxu0 0
    %799 = vmatpush1.bf16.msra.mxu0 %v462
    %800 = vmatprep.subr.bf16.mxu0 0
    %801 = vmatpush1.bf16.msra.mxu0 %v463
    %802 = vmatprep.subr.bf16.mxu0 0
    %803 = vmatpush1.bf16.msra.mxu0 %v464
    %804 = vmatprep.subr.bf16.mxu0 0
    %805 = vmatpush1.bf16.msra.mxu0 %v465
    %806 = vmatprep.subr.bf16.mxu0 0
    %807 = vmatpush1.bf16.msra.mxu0 0
    %808 = vmatprep.subr.bf16.mxu0 0
    %809 = vmatpush1.bf16.msra.mxu0 0
    %810 = vmatprep.subr.bf16.mxu0 0
    %811 = vmatpush1.bf16.msra.mxu0 0
    %812 = vmatprep.subr.bf16.mxu0 0
    %813 = vmatpush1.bf16.msra.mxu0 0
    %814 = vmatprep.subr.bf16.mxu0 0
    %815 = vmatpush1.bf16.msra.mxu0 0
    %816 = vmatprep.subr.bf16.mxu0 0
    %817 = vmatpush1.bf16.msra.mxu0 0
    %818 = vmatprep.subr.bf16.mxu0 0
    %819 = vmatpush1.bf16.msra.mxu0 0
    %820 = vmatprep.subr.bf16.mxu0 0
    %821 = vmatpush1.bf16.msra.mxu0 0
    %822 = vmatprep.mubr.bf16.mxu0 0
    %823 = vmatmul.mubr.bf16.gmra.mrb[0].mxu0 %v788
    %v824 = vpop.f32.mrb[0].mxu0
    %v825 = vadd.f32 0.0, %v824
    %v826 = vpop.f32.mrb[0].mxu0
    %v827 = vpop.f32.mrb[0].mxu0
    %v828 = vadd.f32 0.0, %v827
    %v829 = vpop.f32.mrb[0].mxu0
    %830 = vdwg.mxu0
    %v831 = vadd.f32 %v778, %v825
    %v832 = vadd.f32 %v779, %v828
    %v833 = vrot.slane %v635, 2
    %v834 = vrot.slane %v636, 2
    %v835 = vsel %vm517, %v833, %v834
    %837 = vmatprep.subr.bf16.mxu0 0
    %838 = vmatpush1.bf16.msra.mxu0 %v554
    %839 = vmatprep.subr.bf16.mxu0 0
    %840 = vmatpush1.bf16.msra.mxu0 %v555
    %841 = vmatprep.subr.bf16.mxu0 0
    %842 = vmatpush1.bf16.msra.mxu0 %v556
    %843 = vmatprep.subr.bf16.mxu0 0
    %844 = vmatpush1.bf16.msra.mxu0 %v557
    %845 = vmatprep.subr.bf16.mxu0 0
    %846 = vmatpush1.bf16.msra.mxu0 %v558
    %847 = vmatprep.subr.bf16.mxu0 0
    %848 = vmatpush1.bf16.msra.mxu0 %v559
    %849 = vmatprep.subr.bf16.mxu0 0
    %850 = vmatpush1.bf16.msra.mxu0 %v560
    %851 = vmatprep.subr.bf16.mxu0 0
    %852 = vmatpush1.bf16.msra.mxu0 %v561
    %853 = vmatprep.subr.bf16.mxu0 0
    %854 = vmatpush1.bf16.msra.mxu0 0
    %855 = vmatprep.subr.bf16.mxu0 0
    %856 = vmatpush1.bf16.msra.mxu0 0
    %857 = vmatprep.subr.bf16.mxu0 0
    %858 = vmatpush1.bf16.msra.mxu0 0
    %859 = vmatprep.subr.bf16.mxu0 0
    %860 = vmatpush1.bf16.msra.mxu0 0
    %861 = vmatprep.subr.bf16.mxu0 0
    %862 = vmatpush1.bf16.msra.mxu0 0
    %863 = vmatprep.subr.bf16.mxu0 0
    %864 = vmatpush1.bf16.msra.mxu0 0
    %865 = vmatprep.subr.bf16.mxu0 0
    %866 = vmatpush1.bf16.msra.mxu0 0
    %867 = vmatprep.subr.bf16.mxu0 0
    %868 = vmatpush1.bf16.msra.mxu0 0
    %869 = vmatprep.mubr.bf16.mxu0 0
    %870 = vmatmul.mubr.bf16.gmra.mrb[0].mxu0 %v835
    %v871 = vpop.f32.mrb[0].mxu0
    %v872 = vadd.f32 0.0, %v871
    %v873 = vpop.f32.mrb[0].mxu0
    %v874 = vpop.f32.mrb[0].mxu0
    %v875 = vadd.f32 0.0, %v874
    %v876 = vpop.f32.mrb[0].mxu0
    %877 = vdwg.mxu0
    %v878 = vadd.f32 %v831, %v872
    %v879 = vadd.f32 %v832, %v875
    %v880 = vadd.f32 %v878, %v617
    %v881 = vadd.f32 %v879, %v617
    %v882 = vmax.f32 %v880, 0.0
    %v883 = vmax.f32 %v881, 0.0
    %s884 = scalar_lea.vmem [#allocation5], 16
    %885 = vst [vmem:[%s884] sm:$0xff] %v882
    %886 = vst [vmem:[%s884 + $0x8] sm:$0xff] %v883
    // Predicated region
    $region18: #{tpu_custom_call.1} parent=1 // pred_check
      _
    $region19: #{tpu_custom_call.1} parent=1 // pred_check_branch
      %888 = sbr.rel (0) target = $region21
    $region20: #{tpu_custom_call.1} parent=1 // pred_region
      %s890 = ssub.s32 512, 512
      %891 = vsyncadd [#allocation4], %s890
      %s892 = sshll.u32 [#allocation5], 4
      %s893 = int_to_ptr.vmem [resolvable:$true] %s892
      %898 = dma.vmem_to_hbm [thread:$0]  %s893, 512, %s3, [#allocation4], 128, 128, 8
    $region21: #{tpu_custom_call.1} parent=1 // pred_fallthru
      _
    // Predicated region
    $region22: #{tpu_custom_call.1} parent=1 // pred_check
      _
    $region23: #{tpu_custom_call.1} parent=1 // pred_check_branch
      %900 = sbr.rel (0) target = $region25
    $region24: #{tpu_custom_call.1} parent=1 // pred_region
      %901 = dma.done [#allocation4], 512
    $region25: #{tpu_custom_call.1} parent=1 // pred_fallthru
      _
    %902 = vsyncpa [#allocation3], 1
    %903 = vsyncpa [#allocation4], 1

</llo_original>
